<compile_context>
chip_gen: v7x
topology: tpu7x:2x2x1
jax: 0.10.0
libtpu: 0.0.40
codegen_flags: <defaults>
</compile_context>

<pallas_src>
import functools

import jax
import jax.numpy as jnp
from jax.experimental import pallas as pl
from jax.experimental.pallas import tpu as pltpu

LANE = 128     # lane width / MXU K,N alignment
SUBLANE = 8    # f32 sublane


def _round_up(a, b):
    return ((a + b - 1) // b) * b


def _cdiv(a, b):
    return (a + b - 1) // b


# ------------------------------ kernel ------------------------------
def _bottleneck_mlp_kernel(x_ref, w1_ref, b1_ref, w2_ref, b2_ref,
                           w3_ref, b3_ref, o_ref, *, mxu_dtype):
    """One row-tile of the fused 3-layer bottleneck MLP + residual."""
    # MXU operands are fed as `mxu_dtype` (bf16 by default -> single-pass MXU);
    # accumulation, bias, ReLU and the residual stay in float32.
    h = jnp.dot(x_ref[...].astype(mxu_dtype), w1_ref[...].astype(mxu_dtype),
                preferred_element_type=jnp.float32)
    h = jnp.maximum(h + b1_ref[...], 0.0)                         # ReLU 1
    h = jnp.dot(h.astype(mxu_dtype), w2_ref[...].astype(mxu_dtype),
                preferred_element_type=jnp.float32)
    h = jnp.maximum(h + b2_ref[...], 0.0)                         # ReLU 2
    y = jnp.dot(h.astype(mxu_dtype), w3_ref[...].astype(mxu_dtype),
                preferred_element_type=jnp.float32)
    y = y + b3_ref[...]
    # Re-read x from VMEM for the residual instead of keeping it live across
    # all three dots (lower vreg pressure at large tm; vld is cheap).
    o_ref[...] = (y + x_ref[...]).astype(o_ref.dtype)


# ------------------------------ wrapper ------------------------------
def _vmem_capacity_bytes():
    """Physical VMEM of the current chip (fallback: 64 MiB, the v7x floor)."""
    try:
        return int(pltpu.get_tpu_info().vmem_capacity_bytes)
    except Exception:   # off-TPU / API drift — stay conservative
        return 64 << 20


def _choose_row_tile(n_rows, per_row_bytes, fixed_bytes, budget_bytes):
    """Pick the row tile (tm) and grid size from the VMEM budget."""
    avail = max(budget_bytes - fixed_bytes, per_row_bytes * SUBLANE)
    tm_cap = int(min(max(avail // per_row_bytes, SUBLANE), 2048))
    if n_rows <= min(256, tm_cap):
        # One full block: per-step overhead dominates at this size.
        return n_rows, 1
    # >= 2 tiles so the "parallel" row axis spans both v7x TensorCores.
    n_tiles = max(2, _cdiv(n_rows, tm_cap))
    tm = _cdiv(n_rows, n_tiles)
    # Sublane-align always; snap to the MXU tile (128) when it costs <10% padding.
    tm8, tm128 = _round_up(tm, SUBLANE), _round_up(tm, LANE)
    tm = tm128 if (tm128 - tm8) * n_tiles * 10 <= n_rows else tm8
    tm = max(min(tm, _round_up(tm_cap, SUBLANE)), SUBLANE)
    return tm, _cdiv(n_rows, tm)


def bottleneck_perceptron_3_layer_res(x, params, *, use_bf16_matmul=True):
    """Fused forward pass of the 3-layer bottleneck MLP with residual."""
    w1, b1 = params["w1"], params["b1"]
    w2, b2 = params["w2"], params["b2"]
    w3, b3 = params["w3"], params["b3"]

    orig_shape, orig_dtype = x.shape, x.dtype
    d = orig_shape[-1]
    h = w1.shape[1]

    # ---- lane-dense zero padding of the feature / bottleneck dims ----
    d_p, h_p = _round_up(d, LANE), _round_up(h, LANE)
    x2 = x.reshape(-1, d)
    n_rows = x2.shape[0]
    if d_p != d:
        x2 = jnp.pad(x2, ((0, 0), (0, d_p - d)))
    if d_p != d or h_p != h:
        w1 = jnp.pad(w1, ((0, d_p - d), (0, h_p - h)))
        w2 = jnp.pad(w2, ((0, h_p - h), (0, h_p - h)))
        w3 = jnp.pad(w3, ((0, h_p - h), (0, d_p - d)))
        b1 = jnp.pad(b1, (0, h_p - h))
        b2 = jnp.pad(b2, (0, h_p - h))
        b3 = jnp.pad(b3, (0, d_p - d))
    b1 = b1.reshape(1, h_p)
    b2 = b2.reshape(1, h_p)
    b3 = b3.reshape(1, d_p)

    # ---- VMEM budgeting: single-buffered weights + double-buffered x/out tiles ----
    w_bytes = ((w1.size + w2.size + w3.size) * w1.dtype.itemsize
               + (b1.size + b2.size + b3.size) * 4)
    per_row = (2 * x2.dtype.itemsize * d_p        # x tile, double-buffered
               + 2 * orig_dtype.itemsize * d_p    # out tile, double-buffered
               + 3 * 4 * h_p)                     # in-flight f32 intermediates (slack)
    vmem_cap = _vmem_capacity_bytes()
    tm, n_tiles = _choose_row_tile(n_rows, per_row, w_bytes, int(vmem_cap * 0.75))
    # TODO(synk): for very large in_dim (resident weights > ~half of v7x's 64 MiB
    # VMEM) fall back to a K/N weight-tiled grid with an f32 VMEM accumulator
    # instead of keeping all weights resident.

    vmem_limit = w_bytes + per_row * tm + (8 << 20)           # + Mosaic headroom
    vmem_limit = int(min(max(vmem_limit, 32 << 20), vmem_cap * 15 // 16))

    mxu_dtype = jnp.bfloat16 if use_bf16_matmul else jnp.float32
    kernel = functools.partial(_bottleneck_mlp_kernel, mxu_dtype=mxu_dtype)

    flops = 2 * n_rows * (d_p * h_p + h_p * h_p + h_p * d_p)
    bytes_accessed = int((x2.dtype.itemsize + orig_dtype.itemsize) * n_rows * d_p
                         + w_bytes)

    # Weights / biases: constant index_map -> single-buffered, resident in VMEM.
    resident = functools.partial(pl.BlockSpec, pipeline_mode=pl.Buffered(1))

    out = pl.pallas_call(
        kernel,
        out_shape=jax.ShapeDtypeStruct((n_rows, d_p), orig_dtype),
        grid=(n_tiles,),
        in_specs=[
            pl.BlockSpec((tm, d_p), lambda i: (i, 0)),      # x row tile
            resident((d_p, h_p), lambda i: (0, 0)),         # W1
            resident((1, h_p), lambda i: (0, 0)),           # b1
            resident((h_p, h_p), lambda i: (0, 0)),         # W2
            resident((1, h_p), lambda i: (0, 0)),           # b2
            resident((h_p, d_p), lambda i: (0, 0)),         # W3
            resident((1, d_p), lambda i: (0, 0)),           # b3
        ],
        out_specs=pl.BlockSpec((tm, d_p), lambda i: (i, 0)),
        compiler_params=pltpu.CompilerParams(
            dimension_semantics=("parallel",),
            vmem_limit_bytes=vmem_limit),
        cost_estimate=pl.CostEstimate(
            flops=flops, transcendentals=0, bytes_accessed=bytes_accessed),
    )(x2, w1, b1, w2, b2, w3, b3)

    if d_p != d:
        out = out[:, :d]
    return out.reshape(orig_shape)


# -------------------------- params & reference --------------------------
def init_params(key, in_dim):
    hid = in_dim // 2
    keys = jax.random.split(key, 6)
    s = 1.0 / jnp.sqrt(jnp.float32(in_dim))

    def u(k, shape):
        return jax.random.uniform(k, shape, jnp.float32, -s, s)

    return {
        "w1": u(keys[0], (in_dim, hid)), "b1": u(keys[1], (hid,)),
        "w2": u(keys[2], (hid, hid)),    "b2": u(keys[3], (hid,)),
        "w3": u(keys[4], (hid, in_dim)), "b3": u(keys[5], (in_dim,)),
    }


def reference_forward(x, params):
    mm = lambda a, b: jnp.dot(a, b, precision=jax.lax.Precision.HIGHEST)
    h = jax.nn.relu(mm(x, params["w1"]) + params["b1"])
    h = jax.nn.relu(mm(h, params["w2"]) + params["b2"])
    return mm(h, params["w3"]) + params["b3"] + x


# ------------------------------ main ------------------------------
if __name__ == "__main__":
    IN_DIM = 128          # bottleneck hidden = 64 (padded to 128 in-kernel)
    BATCH, SEQ = 4, 8     # x: (4, 8, 128) -> 32 rows

    key = jax.random.PRNGKey(0)
    kp, kx = jax.random.split(key)
    params = init_params(kp, IN_DIM)
    x = jax.random.normal(kx, (BATCH, SEQ, IN_DIM), jnp.float32)
    ref = reference_forward(x, params)

    # 1) Exact-precision path (f32 MXU operands): tight structural check.
    fwd_f32 = jax.jit(functools.partial(bottleneck_perceptron_3_layer_res,
                                        use_bf16_matmul=False))
    out_f32 = fwd_f32(x, params)
    jax.block_until_ready(out_f32)
    assert out_f32.shape == x.shape and out_f32.dtype == x.dtype
    assert jnp.allclose(out_f32, ref, atol=1e-4, rtol=1e-4), (
        float(jnp.max(jnp.abs(out_f32 - ref))))

    # 2) Default fast path (bf16 MXU operands, f32 accumulation).
    fwd = jax.jit(bottleneck_perceptron_3_layer_res)
    out = fwd(x, params)
    jax.block_until_ready(out)
    assert out.shape == x.shape and out.dtype == x.dtype
    assert jnp.allclose(out, ref, atol=5e-2, rtol=5e-2), (
        float(jnp.max(jnp.abs(out - ref))))

    print("KERNEL_OK")
</pallas_src>

<mosaic_0001>
module attributes {stable_mosaic.version = 11 : i64} {
  func.func @_bottleneck_mlp_kernel(%arg0: i32, %arg1: memref<32x128xf32, #tpu.memory_space<vmem>>, %arg2: memref<128x128xf32, #tpu.memory_space<vmem>>, %arg3: memref<1x128xf32, #tpu.memory_space<vmem>>, %arg4: memref<128x128xf32, #tpu.memory_space<vmem>>, %arg5: memref<1x128xf32, #tpu.memory_space<vmem>>, %arg6: memref<128x128xf32, #tpu.memory_space<vmem>>, %arg7: memref<1x128xf32, #tpu.memory_space<vmem>>, %arg8: memref<32x128xf32, #tpu.memory_space<vmem>>) attributes {dimension_semantics = [#tpu.dimension_semantics<parallel>], iteration_bounds = array<i64: 1>, scalar_prefetch = 0 : i64, scratch_operands = 0 : i64, tpu.core_type = #tpu.core_type<tc>, window_params = [{transform_indices = @transform_0, window_bounds = array<i64: 32, 128>}, {pipeline_mode = #tpu.pipeline_mode<synchronous>, transform_indices = @transform_1, window_bounds = array<i64: 128, 128>}, {pipeline_mode = #tpu.pipeline_mode<synchronous>, transform_indices = @transform_2, window_bounds = array<i64: 1, 128>}, {pipeline_mode = #tpu.pipeline_mode<synchronous>, transform_indices = @transform_3, window_bounds = array<i64: 128, 128>}, {pipeline_mode = #tpu.pipeline_mode<synchronous>, transform_indices = @transform_4, window_bounds = array<i64: 1, 128>}, {pipeline_mode = #tpu.pipeline_mode<synchronous>, transform_indices = @transform_5, window_bounds = array<i64: 128, 128>}, {pipeline_mode = #tpu.pipeline_mode<synchronous>, transform_indices = @transform_6, window_bounds = array<i64: 1, 128>}, {transform_indices = @transform_7, window_bounds = array<i64: 32, 128>}]} {
    %c0 = arith.constant 0 : index
    %c0_0 = arith.constant 0 : index
    %0 = vector.load %arg1[%c0, %c0_0] : memref<32x128xf32, #tpu.memory_space<vmem>>, vector<32x128xf32>
    %c0_1 = arith.constant 0 : index
    %c0_2 = arith.constant 0 : index
    %1 = vector.load %arg2[%c0_1, %c0_2] : memref<128x128xf32, #tpu.memory_space<vmem>>, vector<128x128xf32>
    %cst = arith.constant dense<0.000000e+00> : vector<32x128xf32>
    %2 = tpu.matmul %0, %1, %cst {dimension_numbers = #tpu.dot_dimension_numbers<[1], [0], [0], [1], [0, 0, 1, 1], [], []>} : vector<32x128xf32>, vector<128x128xf32>, vector<32x128xf32> -> vector<32x128xf32>
    %c0_3 = arith.constant 0 : index
    %c0_4 = arith.constant 0 : index
    %3 = vector.load %arg3[%c0_3, %c0_4] : memref<1x128xf32, #tpu.memory_space<vmem>>, vector<1x128xf32>
    %4 = vector.broadcast %3 : vector<1x128xf32> to vector<32x128xf32>
    %5 = arith.addf %2, %4 : vector<32x128xf32>
    %cst_5 = arith.constant 0.000000e+00 : f32
    %6 = vector.broadcast %cst_5 : f32 to vector<32x128xf32>
    %7 = arith.maximumf %5, %6 : vector<32x128xf32>
    %c0_6 = arith.constant 0 : index
    %c0_7 = arith.constant 0 : index
    %8 = vector.load %arg4[%c0_6, %c0_7] : memref<128x128xf32, #tpu.memory_space<vmem>>, vector<128x128xf32>
    %cst_8 = arith.constant dense<0.000000e+00> : vector<32x128xf32>
    %9 = tpu.matmul %7, %8, %cst_8 {dimension_numbers = #tpu.dot_dimension_numbers<[1], [0], [0], [1], [0, 0, 1, 1], [], []>} : vector<32x128xf32>, vector<128x128xf32>, vector<32x128xf32> -> vector<32x128xf32>
    %c0_9 = arith.constant 0 : index
    %c0_10 = arith.constant 0 : index
    %10 = vector.load %arg5[%c0_9, %c0_10] : memref<1x128xf32, #tpu.memory_space<vmem>>, vector<1x128xf32>
    %11 = vector.broadcast %10 : vector<1x128xf32> to vector<32x128xf32>
    %12 = arith.addf %9, %11 : vector<32x128xf32>
    %cst_11 = arith.constant 0.000000e+00 : f32
    %13 = vector.broadcast %cst_11 : f32 to vector<32x128xf32>
    %14 = arith.maximumf %12, %13 : vector<32x128xf32>
    %c0_12 = arith.constant 0 : index
    %c0_13 = arith.constant 0 : index
    %15 = vector.load %arg6[%c0_12, %c0_13] : memref<128x128xf32, #tpu.memory_space<vmem>>, vector<128x128xf32>
    %cst_14 = arith.constant dense<0.000000e+00> : vector<32x128xf32>
    %16 = tpu.matmul %14, %15, %cst_14 {dimension_numbers = #tpu.dot_dimension_numbers<[1], [0], [0], [1], [0, 0, 1, 1], [], []>} : vector<32x128xf32>, vector<128x128xf32>, vector<32x128xf32> -> vector<32x128xf32>
    %c0_15 = arith.constant 0 : index
    %c0_16 = arith.constant 0 : index
    %17 = vector.load %arg7[%c0_15, %c0_16] : memref<1x128xf32, #tpu.memory_space<vmem>>, vector<1x128xf32>
    %18 = vector.broadcast %17 : vector<1x128xf32> to vector<32x128xf32>
    %19 = arith.addf %16, %18 : vector<32x128xf32>
    %c0_17 = arith.constant 0 : index
    %c0_18 = arith.constant 0 : index
    %20 = vector.load %arg1[%c0_17, %c0_18] : memref<32x128xf32, #tpu.memory_space<vmem>>, vector<32x128xf32>
    %21 = arith.addf %19, %20 : vector<32x128xf32>
    %c0_19 = arith.constant 0 : index
    %c0_20 = arith.constant 0 : index
    %22 = vector.load %arg8[%c0_19, %c0_20] : memref<32x128xf32, #tpu.memory_space<vmem>>, vector<32x128xf32>
    tpu.vector_store %arg8[%c0_19, %c0_20], %21 {strides = array<i32>} : memref<32x128xf32, #tpu.memory_space<vmem>>, vector<32x128xf32>,
    return
  }
  func.func @transform_0(%arg0: i32) -> (i32, i32) {
    %c0_i32 = arith.constant 0 : i32
    %c0_i32_0 = arith.constant 0 : i32
    return %arg0, %c0_i32 : i32, i32
  }
  func.func @transform_1(%arg0: i32) -> (i32, i32) {
    %c0_i32 = arith.constant 0 : i32
    %c0_i32_0 = arith.constant 0 : i32
    %c0_i32_1 = arith.constant 0 : i32
    return %c0_i32, %c0_i32_0 : i32, i32
  }
  func.func @transform_2(%arg0: i32) -> (i32, i32) {
    %c0_i32 = arith.constant 0 : i32
    %c0_i32_0 = arith.constant 0 : i32
    %c0_i32_1 = arith.constant 0 : i32
    return %c0_i32, %c0_i32_0 : i32, i32
  }
  func.func @transform_3(%arg0: i32) -> (i32, i32) {
    %c0_i32 = arith.constant 0 : i32
    %c0_i32_0 = arith.constant 0 : i32
    %c0_i32_1 = arith.constant 0 : i32
    return %c0_i32, %c0_i32_0 : i32, i32
  }
  func.func @transform_4(%arg0: i32) -> (i32, i32) {
    %c0_i32 = arith.constant 0 : i32
    %c0_i32_0 = arith.constant 0 : i32
    %c0_i32_1 = arith.constant 0 : i32
    return %c0_i32, %c0_i32_0 : i32, i32
  }
  func.func @transform_5(%arg0: i32) -> (i32, i32) {
    %c0_i32 = arith.constant 0 : i32
    %c0_i32_0 = arith.constant 0 : i32
    %c0_i32_1 = arith.constant 0 : i32
    return %c0_i32, %c0_i32_0 : i32, i32
  }
  func.func @transform_6(%arg0: i32) -> (i32, i32) {
    %c0_i32 = arith.constant 0 : i32
    %c0_i32_0 = arith.constant 0 : i32
    %c0_i32_1 = arith.constant 0 : i32
    return %c0_i32, %c0_i32_0 : i32, i32
  }
  func.func @transform_7(%arg0: i32) -> (i32, i32) {
    %c0_i32 = arith.constant 0 : i32
    %c0_i32_0 = arith.constant 0 : i32
    return %arg0, %c0_i32 : i32, i32
  }
}

</mosaic_0001>

<llo_original>
// kernel: bottleneck_perceptron_3_layer_res.1
$region0: #{bottleneck_perceptron_3_layer_res.1}
  #allocation0 [shape = 'u32[]', space=smem, size = 0x4, offset = 0x4, fixed_abs, tag = 'smem constant byte address 0x4 - core index']
  #allocation1 [shape = 'u32[144,128]{1,0:T(1,128)}', space=vmem, size = 0x12000, scoped, tag = 'internal scratch']
  %s0 = inlined_call_operand.vmem [shape: f32[32,128], index: 0, kind: input, shape index: {}]
  %s1 = inlined_call_operand.vmem [shape: f32[128,128], index: 1, kind: input, shape index: {}]
  %s2 = inlined_call_operand.vmem [shape: f32[1,128], index: 2, kind: input, shape index: {}]
  %s3 = inlined_call_operand.vmem [shape: f32[128,128], index: 3, kind: input, shape index: {}]
  %s4 = inlined_call_operand.vmem [shape: f32[1,128], index: 4, kind: input, shape index: {}]
  %s5 = inlined_call_operand.vmem [shape: f32[128,128], index: 5, kind: input, shape index: {}]
  %s6 = inlined_call_operand.vmem [shape: f32[1,128], index: 6, kind: input, shape index: {}]
  %s7 = inlined_call_operand.hbm [shape: f32[32,128], index: 7, kind: output, shape index: {}]
  %s8 = sld [smem:[#allocation0]]
  $region38: #{bottleneck_perceptron_3_layer_res.1} parent=0
    _
  %s10 = ssub.s32 1, %s8
  %s11 = scalar_select 0, %s10, %s8
  $region1: #{bottleneck_perceptron_3_layer_res.1} parent=0
    #allocation2 [shape = 'u8[16384]{0}', space=vmem, size = 0x4000, scoped, tag = 'output window, operand 0, single buffered']
    #allocation3 [shape = 's32[1]{0}', space=sflag, size = 0x4, scoped, tag = 'scoped memory for bottleneck_perceptron_3_layer_res.1']
    %12 = vsyncpa [#allocation3], 0
    // Predicated region
    $region2: #{bottleneck_perceptron_3_layer_res.1} parent=1 // pred_check
      _
    $region3: #{bottleneck_perceptron_3_layer_res.1} parent=1 // pred_check_branch
      %14 = sbr.rel (0) target = $region5
    $region4: #{bottleneck_perceptron_3_layer_res.1} parent=1 // pred_region
      _
    $region5: #{bottleneck_perceptron_3_layer_res.1} parent=1 // pred_fallthru
      _
    // Predicated region
    $region6: #{bottleneck_perceptron_3_layer_res.1} parent=1 // pred_check
      _
    $region7: #{bottleneck_perceptron_3_layer_res.1} parent=1 // pred_check_branch
      %16 = sbr.rel (0) target = $region9
    $region8: #{bottleneck_perceptron_3_layer_res.1} parent=1 // pred_region
      _
    $region9: #{bottleneck_perceptron_3_layer_res.1} parent=1 // pred_fallthru
      _
    // Predicated region
    $region10: #{bottleneck_perceptron_3_layer_res.1} parent=1 // pred_check
      _
    $region11: #{bottleneck_perceptron_3_layer_res.1} parent=1 // pred_check_branch
      %18 = sbr.rel (0) target = $region13
    $region12: #{bottleneck_perceptron_3_layer_res.1} parent=1 // pred_region
      _
    $region13: #{bottleneck_perceptron_3_layer_res.1} parent=1 // pred_fallthru
      _
    // Predicated region
    $region14: #{bottleneck_perceptron_3_layer_res.1} parent=1 // pred_check
      _
    $region15: #{bottleneck_perceptron_3_layer_res.1} parent=1 // pred_check_branch
      %20 = sbr.rel (0) target = $region17
    $region16: #{bottleneck_perceptron_3_layer_res.1} parent=1 // pred_region
      _
    $region17: #{bottleneck_perceptron_3_layer_res.1} parent=1 // pred_fallthru
      _
    // Predicated region
    $region18: #{bottleneck_perceptron_3_layer_res.1} parent=1 // pred_check
      _
    $region19: #{bottleneck_perceptron_3_layer_res.1} parent=1 // pred_check_branch
      %22 = sbr.rel (0) target = $region21
    $region20: #{bottleneck_perceptron_3_layer_res.1} parent=1 // pred_region
      _
    $region21: #{bottleneck_perceptron_3_layer_res.1} parent=1 // pred_fallthru
      _
    // Predicated region
    $region22: #{bottleneck_perceptron_3_layer_res.1} parent=1 // pred_check
      _
    $region23: #{bottleneck_perceptron_3_layer_res.1} parent=1 // pred_check_branch
      %24 = sbr.rel (0) target = $region25
    $region24: #{bottleneck_perceptron_3_layer_res.1} parent=1 // pred_region
      _
    $region25: #{bottleneck_perceptron_3_layer_res.1} parent=1 // pred_fallthru
      _
    // Predicated region
    $region26: #{bottleneck_perceptron_3_layer_res.1} parent=1 // pred_check
      _
    $region27: #{bottleneck_perceptron_3_layer_res.1} parent=1 // pred_check_branch
      %26 = sbr.rel (0) target = $region29
    $region28: #{bottleneck_perceptron_3_layer_res.1} parent=1 // pred_region
      _
    $region29: #{bottleneck_perceptron_3_layer_res.1} parent=1 // pred_fallthru
      _
    %v27 = vld [vmem:[%s0] sm:$0xff]
    %v28 = vld [vmem:[%s0 + $0x8] sm:$0xff]
    %v29 = vld [vmem:[%s0 + $0x10] sm:$0xff]
    %v30 = vld [vmem:[%s0 + $0x18] sm:$0xff]
    %v31 = vld [vmem:[%s1] sm:$0xff]
    %v32 = vld [vmem:[%s1 + $0x8] sm:$0xff]
    %v33 = vld [vmem:[%s1 + $0x10] sm:$0xff]
    %v34 = vld [vmem:[%s1 + $0x18] sm:$0xff]
    %v35 = vld [vmem:[%s1 + $0x20] sm:$0xff]
    %v36 = vld [vmem:[%s1 + $0x28] sm:$0xff]
    %v37 = vld [vmem:[%s1 + $0x30] sm:$0xff]
    %v38 = vld [vmem:[%s1 + $0x38] sm:$0xff]
    %v39 = vld [vmem:[%s1 + $0x40] sm:$0xff]
    %v40 = vld [vmem:[%s1 + $0x48] sm:$0xff]
    %v41 = vld [vmem:[%s1 + $0x50] sm:$0xff]
    %v42 = vld [vmem:[%s1 + $0x58] sm:$0xff]
    %v43 = vld [vmem:[%s1 + $0x60] sm:$0xff]
    %v44 = vld [vmem:[%s1 + $0x68] sm:$0xff]
    %v45 = vld [vmem:[%s1 + $0x70] sm:$0xff]
    %v46 = vld [vmem:[%s1 + $0x78] sm:$0xff]
    %v47 = vld [vmem:[%s2] sm:$0x1]
    %v49 = vlaneseq
    %v50 = vshrl.u32 %v49, 7
    %v51 = vsub.s32 0, %v50
    %v52 = vrot.slane %v47, %v51
    %54 = vmatprep.subr.mxu0 0.0
    %55 = vmatpush1.msra.mxu0 %v31
    %56 = vmatprep.subr.mxu0 0.0
    %57 = vmatpush1.msra.mxu0 %v32
    %58 = vmatprep.subr.mxu0 0.0
    %59 = vmatpush1.msra.mxu0 %v33
    %60 = vmatprep.subr.mxu0 0.0
    %61 = vmatpush1.msra.mxu0 %v34
    %62 = vmatprep.subr.mxu0 0.0
    %63 = vmatpush1.msra.mxu0 %v35
    %64 = vmatprep.subr.mxu0 0.0
    %65 = vmatpush1.msra.mxu0 %v36
    %66 = vmatprep.subr.mxu0 0.0
    %67 = vmatpush1.msra.mxu0 %v37
    %68 = vmatprep.subr.mxu0 0.0
    %69 = vmatpush1.msra.mxu0 %v38
    %70 = vmatprep.subr.mxu0 0.0
    %71 = vmatpush1.msra.mxu0 %v39
    %72 = vmatprep.subr.mxu0 0.0
    %73 = vmatpush1.msra.mxu0 %v40
    %74 = vmatprep.subr.mxu0 0.0
    %75 = vmatpush1.msra.mxu0 %v41
    %76 = vmatprep.subr.mxu0 0.0
    %77 = vmatpush1.msra.mxu0 %v42
    %78 = vmatprep.subr.mxu0 0.0
    %79 = vmatpush1.msra.mxu0 %v43
    %80 = vmatprep.subr.mxu0 0.0
    %81 = vmatpush1.msra.mxu0 %v44
    %82 = vmatprep.subr.mxu0 0.0
    %83 = vmatpush1.msra.mxu0 %v45
    %84 = vmatprep.subr.mxu0 0.0
    %85 = vmatpush1.msra.mxu0 %v46
    %86 = vmatprep.subr.mxu0 0.0
    %87 = vmatpush1.msra.mxu0 0.0
    %88 = vmatprep.subr.mxu0 0.0
    %89 = vmatpush1.msra.mxu0 0.0
    %90 = vmatprep.subr.mxu0 0.0
    %91 = vmatpush1.msra.mxu0 0.0
    %92 = vmatprep.subr.mxu0 0.0
    %93 = vmatpush1.msra.mxu0 0.0
    %94 = vmatprep.subr.mxu0 0.0
    %95 = vmatpush1.msra.mxu0 0.0
    %96 = vmatprep.subr.mxu0 0.0
    %97 = vmatpush1.msra.mxu0 0.0
    %98 = vmatprep.subr.mxu0 0.0
    %99 = vmatpush1.msra.mxu0 0.0
    %100 = vmatprep.subr.mxu0 0.0
    %101 = vmatpush1.msra.mxu0 0.0
    %102 = vmatprep.subr.mxu0 0.0
    %103 = vmatpush1.msra.mxu0 0.0
    %104 = vmatprep.subr.mxu0 0.0
    %105 = vmatpush1.msra.mxu0 0.0
    %106 = vmatprep.subr.mxu0 0.0
    %107 = vmatpush1.msra.mxu0 0.0
    %108 = vmatprep.subr.mxu0 0.0
    %109 = vmatpush1.msra.mxu0 0.0
    %110 = vmatprep.subr.mxu0 0.0
    %111 = vmatpush1.msra.mxu0 0.0
    %112 = vmatprep.subr.mxu0 0.0
    %113 = vmatpush1.msra.mxu0 0.0
    %114 = vmatprep.subr.mxu0 0.0
    %115 = vmatpush1.msra.mxu0 0.0
    %116 = vmatprep.subr.mxu0 0.0
    %117 = vmatpush1.msra.mxu0 0.0
    %118 = vmatprep.mubr.f32.mxu0 0.0
    %119 = vmatmul.mubr.f32.gmra.mrb[0].mxu0 %v27
    %v120 = vpop.f32.mrb[0].mxu0
    %v121 = vadd.f32 %v52, %v120
    %v122 = vpop.f32.mrb[0].mxu0
    %123 = vmatprep.mubr.f32.mxu0 0.0
    %124 = vmatmul.mubr.f32.gmra.mrb[0].mxu0 %v28
    %v125 = vpop.f32.mrb[0].mxu0
    %v126 = vadd.f32 %v52, %v125
    %v127 = vpop.f32.mrb[0].mxu0
    %128 = vmatprep.mubr.f32.mxu0 0.0
    %129 = vmatmul.mubr.f32.gmra.mrb[0].mxu0 %v29
    %v130 = vpop.f32.mrb[0].mxu0
    %v131 = vadd.f32 %v52, %v130
    %v132 = vpop.f32.mrb[0].mxu0
    %133 = vmatprep.mubr.f32.mxu0 0.0
    %134 = vmatmul.mubr.f32.gmra.mrb[0].mxu0 %v30
    %v135 = vpop.f32.mrb[0].mxu0
    %v136 = vadd.f32 %v52, %v135
    %v137 = vpop.f32.mrb[0].mxu0
    %138 = vdwg.mxu0
    %v139 = vmax.f32 %v121, 0.0
    %v140 = vmax.f32 %v126, 0.0
    %v141 = vmax.f32 %v131, 0.0
    %v142 = vmax.f32 %v136, 0.0
    %v143 = vld [vmem:[%s3] sm:$0xff]
    %v144 = vld [vmem:[%s3 + $0x8] sm:$0xff]
    %v145 = vld [vmem:[%s3 + $0x10] sm:$0xff]
    %v146 = vld [vmem:[%s3 + $0x18] sm:$0xff]
    %v147 = vld [vmem:[%s3 + $0x20] sm:$0xff]
    %v148 = vld [vmem:[%s3 + $0x28] sm:$0xff]
    %v149 = vld [vmem:[%s3 + $0x30] sm:$0xff]
    %v150 = vld [vmem:[%s3 + $0x38] sm:$0xff]
    %v151 = vld [vmem:[%s3 + $0x40] sm:$0xff]
    %v152 = vld [vmem:[%s3 + $0x48] sm:$0xff]
    %v153 = vld [vmem:[%s3 + $0x50] sm:$0xff]
    %v154 = vld [vmem:[%s3 + $0x58] sm:$0xff]
    %v155 = vld [vmem:[%s3 + $0x60] sm:$0xff]
    %v156 = vld [vmem:[%s3 + $0x68] sm:$0xff]
    %v157 = vld [vmem:[%s3 + $0x70] sm:$0xff]
    %v158 = vld [vmem:[%s3 + $0x78] sm:$0xff]
    %v159 = vld [vmem:[%s4] sm:$0x1]
    %v161 = vlaneseq
    %v162 = vshrl.u32 %v161, 7
    %v163 = vsub.s32 0, %v162
    %v164 = vrot.slane %v159, %v163
    %166 = vmatprep.subr.mxu0 0.0
    %167 = vmatpush1.msra.mxu0 %v143
    %168 = vmatprep.subr.mxu0 0.0
    %169 = vmatpush1.msra.mxu0 %v144
    %170 = vmatprep.subr.mxu0 0.0
    %171 = vmatpush1.msra.mxu0 %v145
    %172 = vmatprep.subr.mxu0 0.0
    %173 = vmatpush1.msra.mxu0 %v146
    %174 = vmatprep.subr.mxu0 0.0
    %175 = vmatpush1.msra.mxu0 %v147
    %176 = vmatprep.subr.mxu0 0.0
    %177 = vmatpush1.msra.mxu0 %v148
    %178 = vmatprep.subr.mxu0 0.0
    %179 = vmatpush1.msra.mxu0 %v149
    %180 = vmatprep.subr.mxu0 0.0
    %181 = vmatpush1.msra.mxu0 %v150
    %182 = vmatprep.subr.mxu0 0.0
    %183 = vmatpush1.msra.mxu0 %v151
    %184 = vmatprep.subr.mxu0 0.0
    %185 = vmatpush1.msra.mxu0 %v152
    %186 = vmatprep.subr.mxu0 0.0
    %187 = vmatpush1.msra.mxu0 %v153
    %188 = vmatprep.subr.mxu0 0.0
    %189 = vmatpush1.msra.mxu0 %v154
    %190 = vmatprep.subr.mxu0 0.0
    %191 = vmatpush1.msra.mxu0 %v155
    %192 = vmatprep.subr.mxu0 0.0
    %193 = vmatpush1.msra.mxu0 %v156
    %194 = vmatprep.subr.mxu0 0.0
    %195 = vmatpush1.msra.mxu0 %v157
    %196 = vmatprep.subr.mxu0 0.0
    %197 = vmatpush1.msra.mxu0 %v158
    %198 = vmatprep.subr.mxu0 0.0
    %199 = vmatpush1.msra.mxu0 0.0
    %200 = vmatprep.subr.mxu0 0.0
    %201 = vmatpush1.msra.mxu0 0.0
    %202 = vmatprep.subr.mxu0 0.0
    %203 = vmatpush1.msra.mxu0 0.0
    %204 = vmatprep.subr.mxu0 0.0
    %205 = vmatpush1.msra.mxu0 0.0
    %206 = vmatprep.subr.mxu0 0.0
    %207 = vmatpush1.msra.mxu0 0.0
    %208 = vmatprep.subr.mxu0 0.0
    %209 = vmatpush1.msra.mxu0 0.0
    %210 = vmatprep.subr.mxu0 0.0
    %211 = vmatpush1.msra.mxu0 0.0
    %212 = vmatprep.subr.mxu0 0.0
    %213 = vmatpush1.msra.mxu0 0.0
    %214 = vmatprep.subr.mxu0 0.0
    %215 = vmatpush1.msra.mxu0 0.0
    %216 = vmatprep.subr.mxu0 0.0
    %217 = vmatpush1.msra.mxu0 0.0
    %218 = vmatprep.subr.mxu0 0.0
    %219 = vmatpush1.msra.mxu0 0.0
    %220 = vmatprep.subr.mxu0 0.0
    %221 = vmatpush1.msra.mxu0 0.0
    %222 = vmatprep.subr.mxu0 0.0
    %223 = vmatpush1.msra.mxu0 0.0
    %224 = vmatprep.subr.mxu0 0.0
    %225 = vmatpush1.msra.mxu0 0.0
    %226 = vmatprep.subr.mxu0 0.0
    %227 = vmatpush1.msra.mxu0 0.0
    %228 = vmatprep.subr.mxu0 0.0
    %229 = vmatpush1.msra.mxu0 0.0
    %230 = vmatprep.mubr.f32.mxu0 0.0
    %231 = vmatmul.mubr.f32.gmra.mrb[0].mxu0 %v139
    %v232 = vpop.f32.mrb[0].mxu0
    %v233 = vadd.f32 %v164, %v232
    %v234 = vpop.f32.mrb[0].mxu0
    %235 = vmatprep.mubr.f32.mxu0 0.0
    %236 = vmatmul.mubr.f32.gmra.mrb[0].mxu0 %v140
    %v237 = vpop.f32.mrb[0].mxu0
    %v238 = vadd.f32 %v164, %v237
    %v239 = vpop.f32.mrb[0].mxu0
    %240 = vmatprep.mubr.f32.mxu0 0.0
    %241 = vmatmul.mubr.f32.gmra.mrb[0].mxu0 %v141
    %v242 = vpop.f32.mrb[0].mxu0
    %v243 = vadd.f32 %v164, %v242
    %v244 = vpop.f32.mrb[0].mxu0
    %245 = vmatprep.mubr.f32.mxu0 0.0
    %246 = vmatmul.mubr.f32.gmra.mrb[0].mxu0 %v142
    %v247 = vpop.f32.mrb[0].mxu0
    %v248 = vadd.f32 %v164, %v247
    %v249 = vpop.f32.mrb[0].mxu0
    %250 = vdwg.mxu0
    %v251 = vmax.f32 %v233, 0.0
    %v252 = vmax.f32 %v238, 0.0
    %v253 = vmax.f32 %v243, 0.0
    %v254 = vmax.f32 %v248, 0.0
    %v255 = vld [vmem:[%s5] sm:$0xff]
    %v256 = vld [vmem:[%s5 + $0x8] sm:$0xff]
    %v257 = vld [vmem:[%s5 + $0x10] sm:$0xff]
    %v258 = vld [vmem:[%s5 + $0x18] sm:$0xff]
    %v259 = vld [vmem:[%s5 + $0x20] sm:$0xff]
    %v260 = vld [vmem:[%s5 + $0x28] sm:$0xff]
    %v261 = vld [vmem:[%s5 + $0x30] sm:$0xff]
    %v262 = vld [vmem:[%s5 + $0x38] sm:$0xff]
    %v263 = vld [vmem:[%s5 + $0x40] sm:$0xff]
    %v264 = vld [vmem:[%s5 + $0x48] sm:$0xff]
    %v265 = vld [vmem:[%s5 + $0x50] sm:$0xff]
    %v266 = vld [vmem:[%s5 + $0x58] sm:$0xff]
    %v267 = vld [vmem:[%s5 + $0x60] sm:$0xff]
    %v268 = vld [vmem:[%s5 + $0x68] sm:$0xff]
    %v269 = vld [vmem:[%s5 + $0x70] sm:$0xff]
    %v270 = vld [vmem:[%s5 + $0x78] sm:$0xff]
    %v271 = vld [vmem:[%s6] sm:$0x1]
    %v273 = vlaneseq
    %v274 = vshrl.u32 %v273, 7
    %v275 = vsub.s32 0, %v274
    %v276 = vrot.slane %v271, %v275
    %278 = vmatprep.subr.mxu0 0.0
    %279 = vmatpush1.msra.mxu0 %v255
    %280 = vmatprep.subr.mxu0 0.0
    %281 = vmatpush1.msra.mxu0 %v256
    %282 = vmatprep.subr.mxu0 0.0
    %283 = vmatpush1.msra.mxu0 %v257
    %284 = vmatprep.subr.mxu0 0.0
    %285 = vmatpush1.msra.mxu0 %v258
    %286 = vmatprep.subr.mxu0 0.0
    %287 = vmatpush1.msra.mxu0 %v259
    %288 = vmatprep.subr.mxu0 0.0
    %289 = vmatpush1.msra.mxu0 %v260
    %290 = vmatprep.subr.mxu0 0.0
    %291 = vmatpush1.msra.mxu0 %v261
    %292 = vmatprep.subr.mxu0 0.0
    %293 = vmatpush1.msra.mxu0 %v262
    %294 = vmatprep.subr.mxu0 0.0
    %295 = vmatpush1.msra.mxu0 %v263
    %296 = vmatprep.subr.mxu0 0.0
    %297 = vmatpush1.msra.mxu0 %v264
    %298 = vmatprep.subr.mxu0 0.0
    %299 = vmatpush1.msra.mxu0 %v265
    %300 = vmatprep.subr.mxu0 0.0
    %301 = vmatpush1.msra.mxu0 %v266
    %302 = vmatprep.subr.mxu0 0.0
    %303 = vmatpush1.msra.mxu0 %v267
    %304 = vmatprep.subr.mxu0 0.0
    %305 = vmatpush1.msra.mxu0 %v268
    %306 = vmatprep.subr.mxu0 0.0
    %307 = vmatpush1.msra.mxu0 %v269
    %308 = vmatprep.subr.mxu0 0.0
    %309 = vmatpush1.msra.mxu0 %v270
    %310 = vmatprep.subr.mxu0 0.0
    %311 = vmatpush1.msra.mxu0 0.0
    %312 = vmatprep.subr.mxu0 0.0
    %313 = vmatpush1.msra.mxu0 0.0
    %314 = vmatprep.subr.mxu0 0.0
    %315 = vmatpush1.msra.mxu0 0.0
    %316 = vmatprep.subr.mxu0 0.0
    %317 = vmatpush1.msra.mxu0 0.0
    %318 = vmatprep.subr.mxu0 0.0
    %319 = vmatpush1.msra.mxu0 0.0
    %320 = vmatprep.subr.mxu0 0.0
    %321 = vmatpush1.msra.mxu0 0.0
    %322 = vmatprep.subr.mxu0 0.0
    %323 = vmatpush1.msra.mxu0 0.0
    %324 = vmatprep.subr.mxu0 0.0
    %325 = vmatpush1.msra.mxu0 0.0
    %326 = vmatprep.subr.mxu0 0.0
    %327 = vmatpush1.msra.mxu0 0.0
    %328 = vmatprep.subr.mxu0 0.0
    %329 = vmatpush1.msra.mxu0 0.0
    %330 = vmatprep.subr.mxu0 0.0
    %331 = vmatpush1.msra.mxu0 0.0
    %332 = vmatprep.subr.mxu0 0.0
    %333 = vmatpush1.msra.mxu0 0.0
    %334 = vmatprep.subr.mxu0 0.0
    %335 = vmatpush1.msra.mxu0 0.0
    %336 = vmatprep.subr.mxu0 0.0
    %337 = vmatpush1.msra.mxu0 0.0
    %338 = vmatprep.subr.mxu0 0.0
    %339 = vmatpush1.msra.mxu0 0.0
    %340 = vmatprep.subr.mxu0 0.0
    %341 = vmatpush1.msra.mxu0 0.0
    %342 = vmatprep.mubr.f32.mxu0 0.0
    %343 = vmatmul.mubr.f32.gmra.mrb[0].mxu0 %v251
    %v344 = vpop.f32.mrb[0].mxu0
    %v345 = vadd.f32 %v276, %v344
    %v346 = vpop.f32.mrb[0].mxu0
    %347 = vmatprep.mubr.f32.mxu0 0.0
    %348 = vmatmul.mubr.f32.gmra.mrb[0].mxu0 %v252
    %v349 = vpop.f32.mrb[0].mxu0
    %v350 = vadd.f32 %v276, %v349
    %v351 = vpop.f32.mrb[0].mxu0
    %352 = vmatprep.mubr.f32.mxu0 0.0
    %353 = vmatmul.mubr.f32.gmra.mrb[0].mxu0 %v253
    %v354 = vpop.f32.mrb[0].mxu0
    %v355 = vadd.f32 %v276, %v354
    %v356 = vpop.f32.mrb[0].mxu0
    %357 = vmatprep.mubr.f32.mxu0 0.0
    %358 = vmatmul.mubr.f32.gmra.mrb[0].mxu0 %v254
    %v359 = vpop.f32.mrb[0].mxu0
    %v360 = vadd.f32 %v276, %v359
    %v361 = vpop.f32.mrb[0].mxu0
    %362 = vdwg.mxu0
    %v363 = vadd.f32 %v345, %v27
    %v364 = vadd.f32 %v350, %v28
    %v365 = vadd.f32 %v355, %v29
    %v366 = vadd.f32 %v360, %v30
    %367 = vst [vmem:[#allocation2] sm:$0xff] %v363
    %368 = vst [vmem:[#allocation2 + $0x8] sm:$0xff] %v364
    %369 = vst [vmem:[#allocation2 + $0x10] sm:$0xff] %v365
    %370 = vst [vmem:[#allocation2 + $0x18] sm:$0xff] %v366
    // Predicated region
    $region30: #{bottleneck_perceptron_3_layer_res.1} parent=1 // pred_check
      _
    $region31: #{bottleneck_perceptron_3_layer_res.1} parent=1 // pred_check_branch
      %372 = sbr.rel (0) target = $region33
    $region32: #{bottleneck_perceptron_3_layer_res.1} parent=1 // pred_region
      %s374 = ssub.s32 512, 512
      %375 = vsyncadd [#allocation3], %s374
      %s376 = sshll.u32 [#allocation2], 4
      %s377 = int_to_ptr.vmem [resolvable:$true] %s376
      %382 = dma.vmem_to_hbm [thread:$0]  %s377, 512, %s7, [#allocation3], 128, 128, 8
    $region33: #{bottleneck_perceptron_3_layer_res.1} parent=1 // pred_fallthru
      _
    // Predicated region
    $region34: #{bottleneck_perceptron_3_layer_res.1} parent=1 // pred_check
      _
    $region35: #{bottleneck_perceptron_3_layer_res.1} parent=1 // pred_check_branch
      %384 = sbr.rel (0) target = $region37
    $region36: #{bottleneck_perceptron_3_layer_res.1} parent=1 // pred_region
      %385 = dma.done [#allocation3], 512
    $region37: #{bottleneck_perceptron_3_layer_res.1} parent=1 // pred_fallthru
      _
    %386 = vsyncpa [#allocation3], 1

</llo_original>
